<compile_context>
chip_gen: v6e
topology: v6e:2x2x1
jax: 0.10.0
libtpu: 0.0.40
codegen_flags: <defaults>
</compile_context>

<pallas_src>
import math
from typing import NamedTuple, Optional

import jax
import jax.numpy as jnp
from jax.experimental import pallas as pl
from jax.experimental.pallas import tpu as pltpu


_LANE = 128
_VMEM_TILE_BUDGET = 28 * 1024 * 1024   # target for double-buffered tile footprint
_VMEM_LIMIT_BYTES = 48 * 1024 * 1024   # < 64 MiB (v7x physical), well under v5e/v6e 128 MiB


def _round_up(x, m):
    return ((x + m - 1) // m) * m


class LinearClassifierParams(NamedTuple):
    w_t: jax.Array      # (Kp, Np) padded weight.T in compute dtype (canonical MXU layout)
    b: jax.Array        # (1, Np) float32 padded bias
    in_features: int
    out_features: int
    tn: int             # N tile (divides Np)
    tk: int             # K tile (divides Kp)


def prepare_linear_classifier_params(weight, bias, *, compute_dtype=None,
                                     tn_max=512, tk_max=2048):
    """One-time prep (analogue of loading nn.Linear weights).

    Transposes to (K, N), pads to tile multiples and casts the weight stream to the
    MXU compute dtype.  Done once so the per-call forward never re-pads / copies the
    (possibly large) weight matrix.
    """
    N, K = weight.shape
    assert bias.shape == (N,), "bias must be (out_features,)"
    cdtype = compute_dtype if compute_dtype is not None else weight.dtype

    n128 = _round_up(N, _LANE)
    tn = n128 if n128 <= tn_max else tn_max
    Np = _round_up(N, tn)

    k128 = _round_up(K, _LANE)
    tk = k128 if k128 <= tk_max else tk_max
    Kp = _round_up(K, tk)

    w_t = jnp.pad(weight.T, ((0, Kp - K), (0, Np - N))).astype(cdtype)
    b = jnp.pad(bias.astype(jnp.float32).reshape(1, N), ((0, 0), (0, Np - N)))
    return LinearClassifierParams(w_t=w_t, b=b, in_features=K, out_features=N,
                                  tn=tn, tk=tk)


# ----------------------------- kernels ---------------------------------------


def _linear_kernel_single_k(x_ref, w_ref, b_ref, o_ref):
    """K fits one tile: no accumulator scratch, no pl.when branches."""
    acc = jnp.dot(x_ref[...], w_ref[...], preferred_element_type=jnp.float32)
    o_ref[...] = (acc + b_ref[...]).astype(o_ref.dtype)


def _linear_kernel_multi_k(x_ref, w_ref, b_ref, o_ref, acc_ref):
    """K streamed along grid axis 2 into an f32 VMEM accumulator (bias folded at k==0)."""
    k = pl.program_id(2)

    @pl.when(k == 0)
    def _():
        acc_ref[...] = jnp.broadcast_to(b_ref[...], acc_ref.shape)

    acc_ref[...] += jnp.dot(x_ref[...], w_ref[...],
                            preferred_element_type=jnp.float32)

    @pl.when(k == pl.num_programs(2) - 1)
    def _():
        o_ref[...] = acc_ref[...].astype(o_ref.dtype)


# ----------------------------- forward ----------------------------------------


def linear_classifier_forward(x, params: LinearClassifierParams):
    """Pallas equivalent of LinearClassifier.forward. Returns {'logits': out}."""
    B, K = x.shape
    assert K == params.in_features, "x feature dim must match weight in_features"
    N = params.out_features
    tn, tk = params.tn, params.tk
    Kp, Np = params.w_t.shape
    cdtype = params.w_t.dtype
    c_bytes = jnp.dtype(cdtype).itemsize
    out_dtype = x.dtype
    o_bytes = jnp.dtype(out_dtype).itemsize

    num_k = Kp // tk
    multi_k = num_k > 1

    # bf16 operands need a 16-row sublane tile; f32 needs 8.
    sub = 16 if c_bytes < 4 else 8

    # --- pick tm: stream the weight from HBM as few times as possible (ideally once)
    # while keeping the double-buffered tile footprint under the VMEM budget.
    fixed = 2 * tk * tn * c_bytes + 2 * tn * 4                     # W + bias dbl-buffers
    per_row = 2 * tk * c_bytes + 2 * tn * o_bytes + (tn * 4 if multi_k else 0)
    avail = max(_VMEM_TILE_BUDGET - fixed, per_row * sub)
    tm_cap = max(sub, (avail // per_row) // sub * sub)
    tm_full = _round_up(B, sub)
    if tm_full <= tm_cap:
        tm = tm_full                                    # whole batch in one M block
    else:
        num_m = -(-B // tm_cap)                         # split M evenly -> minimal padding
        tm = _round_up(-(-B // num_m), sub)
    Bp = _round_up(B, tm)

    # Only x (small relative to W) is padded per call; weight/bias were padded once.
    x_p = jnp.pad(x, ((0, Bp - B), (0, Kp - K))).astype(cdtype)

    grid_m, grid_n = Bp // tm, Np // tn

    cost = pl.CostEstimate(
        flops=2 * Bp * Kp * Np,
        bytes_accessed=(grid_n * Bp * Kp * c_bytes       # x re-streamed per N block
                        + grid_m * Np * Kp * c_bytes     # W re-streamed per M block
                        + Bp * Np * o_bytes + Np * 4),
        transcendentals=0,
    )

    if multi_k:
        grid = (grid_m, grid_n, num_k)
        kernel = _linear_kernel_multi_k
        in_specs = [
            pl.BlockSpec((tm, tk), lambda i, j, k: (i, k)),   # x tile
            pl.BlockSpec((tk, tn), lambda i, j, k: (k, j)),   # weight tile (K, N)
            pl.BlockSpec((1, tn), lambda i, j, k: (0, j)),    # bias tile
        ]
        out_specs = pl.BlockSpec((tm, tn), lambda i, j, k: (i, j))
        scratch = [pltpu.VMEM((tm, tn), jnp.float32)]
        semantics = ("parallel", "parallel", "arbitrary")
    else:
        grid = (grid_m, grid_n)
        kernel = _linear_kernel_single_k
        in_specs = [
            pl.BlockSpec((tm, tk), lambda i, j: (i, 0)),
            pl.BlockSpec((tk, tn), lambda i, j: (0, j)),
            pl.BlockSpec((1, tn), lambda i, j: (0, j)),
        ]
        out_specs = pl.BlockSpec((tm, tn), lambda i, j: (i, j))
        scratch = []
        semantics = ("parallel", "parallel")

    out = pl.pallas_call(
        kernel,
        out_shape=jax.ShapeDtypeStruct((Bp, Np), out_dtype),
        grid_spec=pltpu.PrefetchScalarGridSpec(
            num_scalar_prefetch=0,
            grid=grid,
            in_specs=in_specs,
            out_specs=out_specs,
            scratch_shapes=scratch,
        ),
        compiler_params=pltpu.CompilerParams(
            dimension_semantics=semantics,
            vmem_limit_bytes=_VMEM_LIMIT_BYTES,
        ),
        cost_estimate=cost,
    )(x_p, params.w_t, params.b)

    return {"logits": out[:B, :N]}


# ------------------------------ init ------------------------------------------


def init_linear_classifier(key, in_features, out_features, dtype=jnp.float32):
    """Deterministic init matching PyTorch nn.Linear defaults (uniform +/- 1/sqrt(K))."""
    kw, kb = jax.random.split(key)
    bound = 1.0 / math.sqrt(in_features)
    weight = jax.random.uniform(kw, (out_features, in_features), dtype=dtype,
                                minval=-bound, maxval=bound)
    bias = jax.random.uniform(kb, (out_features,), dtype=dtype,
                              minval=-bound, maxval=bound)
    return weight, bias


# TODO(synk): inc_cls / reshape are host-side parameter surgery; in JAX they are
# handled by editing the raw (weight, bias) and re-running prepare_linear_classifier_params.


if __name__ == "__main__":
    key = jax.random.PRNGKey(0)
    k_x, k_p, k_x2, k_p2 = jax.random.split(key, 4)

    # --- small shapes implied by the module's forward (single-K-tile fast path) ---
    batch, in_features, out_features = 8, 32, 16
    x = jax.random.normal(k_x, (batch, in_features), dtype=jnp.float32)
    weight, bias = init_linear_classifier(k_p, in_features, out_features)
    ref = x @ weight.T + bias

    params_f32 = prepare_linear_classifier_params(weight, bias)
    logits = jax.block_until_ready(linear_classifier_forward(x, params_f32)["logits"])
    assert logits.shape == (batch, out_features)
    assert jnp.allclose(logits, ref, atol=1e-4, rtol=1e-4), "f32 single-K mismatch"

    # --- bf16 weight/activation stream with f32 accumulate (looser tolerance) ---
    params_bf16 = prepare_linear_classifier_params(weight, bias,
                                                   compute_dtype=jnp.bfloat16)
    logits_bf16 = jax.block_until_ready(
        linear_classifier_forward(x, params_bf16)["logits"])
    assert logits_bf16.shape == (batch, out_features)
    assert jnp.allclose(logits_bf16, ref, atol=5e-2, rtol=5e-2), "bf16 mismatch"

    # --- multi-K-tile accumulator path (force small tiles to exercise it) ---
    b2, k2, n2 = 16, 256, 384
    x2 = jax.random.normal(k_x2, (b2, k2), dtype=jnp.float32)
    w2, bias2 = init_linear_classifier(k_p2, k2, n2)
    params2 = prepare_linear_classifier_params(w2, bias2, tn_max=128, tk_max=128)
    logits2 = jax.block_until_ready(linear_classifier_forward(x2, params2)["logits"])
    ref2 = x2 @ w2.T + bias2
    assert logits2.shape == (b2, n2)
    assert jnp.allclose(logits2, ref2, atol=2e-3, rtol=2e-3), "f32 multi-K mismatch"

    print("KERNEL_OK")
</pallas_src>

<mosaic_0001>
module attributes {stable_mosaic.version = 11 : i64} {
  func.func @_linear_kernel_single_k(%arg0: i32, %arg1: i32, %arg2: memref<8x128xf32, #tpu.memory_space<vmem>>, %arg3: memref<128x128xf32, #tpu.memory_space<vmem>>, %arg4: memref<1x128xf32, #tpu.memory_space<vmem>>, %arg5: memref<8x128xf32, #tpu.memory_space<vmem>>) attributes {dimension_semantics = [#tpu.dimension_semantics<parallel>, #tpu.dimension_semantics<parallel>], iteration_bounds = array<i64: 1, 1>, scalar_prefetch = 0 : i64, scratch_operands = 0 : i64, tpu.core_type = #tpu.core_type<tc>, window_params = [{transform_indices = @transform_0, window_bounds = array<i64: 8, 128>}, {transform_indices = @transform_1, window_bounds = array<i64: 128, 128>}, {transform_indices = @transform_2, window_bounds = array<i64: 1, 128>}, {transform_indices = @transform_3, window_bounds = array<i64: 8, 128>}]} {
    %c0 = arith.constant 0 : index
    %c0_0 = arith.constant 0 : index
    %0 = vector.load %arg2[%c0, %c0_0] : memref<8x128xf32, #tpu.memory_space<vmem>>, vector<8x128xf32>
    %c0_1 = arith.constant 0 : index
    %c0_2 = arith.constant 0 : index
    %1 = vector.load %arg3[%c0_1, %c0_2] : memref<128x128xf32, #tpu.memory_space<vmem>>, vector<128x128xf32>
    %cst = arith.constant dense<0.000000e+00> : vector<8x128xf32>
    %2 = tpu.matmul %0, %1, %cst {dimension_numbers = #tpu.dot_dimension_numbers<[1], [0], [0], [1], [0, 0, 1, 1], [], []>} : vector<8x128xf32>, vector<128x128xf32>, vector<8x128xf32> -> vector<8x128xf32>
    %c0_3 = arith.constant 0 : index
    %c0_4 = arith.constant 0 : index
    %3 = vector.load %arg4[%c0_3, %c0_4] : memref<1x128xf32, #tpu.memory_space<vmem>>, vector<1x128xf32>
    %4 = vector.broadcast %3 : vector<1x128xf32> to vector<8x128xf32>
    %5 = arith.addf %2, %4 : vector<8x128xf32>
    %c0_5 = arith.constant 0 : index
    %c0_6 = arith.constant 0 : index
    %6 = vector.load %arg5[%c0_5, %c0_6] : memref<8x128xf32, #tpu.memory_space<vmem>>, vector<8x128xf32>
    tpu.vector_store %arg5[%c0_5, %c0_6], %5 {strides = array<i32>} : memref<8x128xf32, #tpu.memory_space<vmem>>, vector<8x128xf32>,
    return
  }
  func.func @transform_0(%arg0: i32, %arg1: i32) -> (i32, i32) {
    %c0_i32 = arith.constant 0 : i32
    %c0_i32_0 = arith.constant 0 : i32
    return %arg0, %c0_i32 : i32, i32
  }
  func.func @transform_1(%arg0: i32, %arg1: i32) -> (i32, i32) {
    %c0_i32 = arith.constant 0 : i32
    %c0_i32_0 = arith.constant 0 : i32
    return %c0_i32, %arg1 : i32, i32
  }
  func.func @transform_2(%arg0: i32, %arg1: i32) -> (i32, i32) {
    %c0_i32 = arith.constant 0 : i32
    %c0_i32_0 = arith.constant 0 : i32
    return %c0_i32, %arg1 : i32, i32
  }
  func.func @transform_3(%arg0: i32, %arg1: i32) -> (i32, i32) {
    %c0_i32 = arith.constant 0 : i32
    return %arg0, %arg1 : i32, i32
  }
}

</mosaic_0001>

<llo_original>
// kernel: tpu_custom_call.1
$region0: #{tpu_custom_call.1}
  #allocation0 [shape = 'u32[]', space=smem, size = 0x4, offset = 0x4, fixed_abs, tag = 'smem constant byte address 0x4 - core index']
  #allocation1 [shape = 'u32[144,128]{1,0:T(1,128)}', space=vmem, size = 0x12000, scoped, tag = 'internal scratch']
  %s0 = inlined_call_operand.hbm [shape: f32[8,128], index: 0, kind: input, shape index: {}]
  %s1 = inlined_call_operand.hbm [shape: f32[128,128], index: 1, kind: input, shape index: {}]
  %s2 = inlined_call_operand.vmem [shape: f32[1,128], index: 2, kind: input, shape index: {}]
  %s3 = inlined_call_operand.hbm [shape: f32[8,128], index: 3, kind: output, shape index: {}]
  %s4 = sld [smem:[#allocation0]]
  $region30: #{tpu_custom_call.1} parent=0
    _
  %s6 = ssub.s32 1, %s4
  %s7 = scalar_select 0, %s6, %s4
  $region1: #{tpu_custom_call.1} parent=0
    #allocation2 [shape = 'u8[4096]{0}', space=vmem, size = 0x1000, scoped, tag = 'input window, operand 0, single buffered']
    #allocation3 [shape = 's32[1]{0}', space=sflag, size = 0x4, scoped, tag = 'scoped memory for tpu_custom_call.1']
    #allocation4 [shape = 's32[1]{0}', space=sflag, size = 0x4, scoped, tag = 'scoped memory for tpu_custom_call.1']
    #allocation5 [shape = 'u8[65536]{0}', space=vmem, size = 0x10000, scoped, tag = 'input window, operand 1, single buffered']
    #allocation6 [shape = 's32[1]{0}', space=sflag, size = 0x4, scoped, tag = 'scoped memory for tpu_custom_call.1']
    #allocation7 [shape = 'u8[4096]{0}', space=vmem, size = 0x1000, scoped, tag = 'output window, operand 0, single buffered']
    %8 = vsyncpa [#allocation3], 0
    %9 = vsyncpa [#allocation6], 0
    %10 = vsyncpa [#allocation4], 0
    // Predicated region
    $region2: #{tpu_custom_call.1} parent=1 // pred_check
      _
    $region3: #{tpu_custom_call.1} parent=1 // pred_check_branch
      %12 = sbr.rel (0) target = $region5
    $region4: #{tpu_custom_call.1} parent=1 // pred_region
      %s14 = ssub.s32 128, 128
      %15 = vsyncadd [#allocation3], %s14
      %s17 = sshll.u32 [#allocation2], 4
      %s18 = int_to_ptr.vmem [resolvable:$true] %s17
      %20 = dma.hbm_to_vmem [thread:$0]  %s0, 128, %s18, [#allocation3]
    $region5: #{tpu_custom_call.1} parent=1 // pred_fallthru
      _
    // Predicated region
    $region6: #{tpu_custom_call.1} parent=1 // pred_check
      _
    $region7: #{tpu_custom_call.1} parent=1 // pred_check_branch
      %22 = sbr.rel (0) target = $region9
    $region8: #{tpu_custom_call.1} parent=1 // pred_region
      %s24 = ssub.s32 2048, 2048
      %25 = vsyncadd [#allocation6], %s24
      %s26 = sshll.u32 [#allocation5], 4
      %s27 = int_to_ptr.vmem [resolvable:$true] %s26
      %32 = dma.hbm_to_vmem [thread:$0]  %s1, 2048, %s27, [#allocation6], 128, 128, 8
    $region9: #{tpu_custom_call.1} parent=1 // pred_fallthru
      _
    // Predicated region
    $region10: #{tpu_custom_call.1} parent=1 // pred_check
      _
    $region11: #{tpu_custom_call.1} parent=1 // pred_check_branch
      %34 = sbr.rel (0) target = $region13
    $region12: #{tpu_custom_call.1} parent=1 // pred_region
      _
    $region13: #{tpu_custom_call.1} parent=1 // pred_fallthru
      _
    // Predicated region
    $region14: #{tpu_custom_call.1} parent=1 // pred_check
      _
    $region15: #{tpu_custom_call.1} parent=1 // pred_check_branch
      %36 = sbr.rel (0) target = $region17
    $region16: #{tpu_custom_call.1} parent=1 // pred_region
      %37 = dma.done [#allocation3], 128
    $region17: #{tpu_custom_call.1} parent=1 // pred_fallthru
      _
    // Predicated region
    $region18: #{tpu_custom_call.1} parent=1 // pred_check
      _
    $region19: #{tpu_custom_call.1} parent=1 // pred_check_branch
      %39 = sbr.rel (0) target = $region21
    $region20: #{tpu_custom_call.1} parent=1 // pred_region
      %40 = dma.done [#allocation6], 2048
    $region21: #{tpu_custom_call.1} parent=1 // pred_fallthru
      _
    %v41 = vld [vmem:[#allocation2] sm:$0xff]
    %v42 = vld [vmem:[#allocation5] sm:$0xff]
    %v43 = vld [vmem:[#allocation5 + $0x8] sm:$0xff]
    %v44 = vld [vmem:[#allocation5 + $0x10] sm:$0xff]
    %v45 = vld [vmem:[#allocation5 + $0x18] sm:$0xff]
    %v46 = vld [vmem:[#allocation5 + $0x20] sm:$0xff]
    %v47 = vld [vmem:[#allocation5 + $0x28] sm:$0xff]
    %v48 = vld [vmem:[#allocation5 + $0x30] sm:$0xff]
    %v49 = vld [vmem:[#allocation5 + $0x38] sm:$0xff]
    %v50 = vld [vmem:[#allocation5 + $0x40] sm:$0xff]
    %v51 = vld [vmem:[#allocation5 + $0x48] sm:$0xff]
    %v52 = vld [vmem:[#allocation5 + $0x50] sm:$0xff]
    %v53 = vld [vmem:[#allocation5 + $0x58] sm:$0xff]
    %v54 = vld [vmem:[#allocation5 + $0x60] sm:$0xff]
    %v55 = vld [vmem:[#allocation5 + $0x68] sm:$0xff]
    %v56 = vld [vmem:[#allocation5 + $0x70] sm:$0xff]
    %v57 = vld [vmem:[#allocation5 + $0x78] sm:$0xff]
    %v58 = vld [vmem:[%s2] sm:$0x1]
    %v60 = vlaneseq
    %v61 = vshrl.u32 %v60, 7
    %v62 = vsub.s32 0, %v61
    %v63 = vrot.slane %v58, %v62
    %65 = vmatprep.subr.mxu0 0.0
    %66 = vmatpush1.msra.mxu0 %v57
    %67 = vmatprep.subr.mxu0 0.0
    %68 = vmatpush1.msra.mxu0 %v56
    %69 = vmatprep.subr.mxu0 0.0
    %70 = vmatpush1.msra.mxu0 %v55
    %71 = vmatprep.subr.mxu0 0.0
    %72 = vmatpush1.msra.mxu0 %v54
    %73 = vmatprep.subr.mxu0 0.0
    %74 = vmatpush1.msra.mxu0 %v53
    %75 = vmatprep.subr.mxu0 0.0
    %76 = vmatpush1.msra.mxu0 %v52
    %77 = vmatprep.subr.mxu0 0.0
    %78 = vmatpush1.msra.mxu0 %v51
    %79 = vmatprep.subr.mxu0 0.0
    %80 = vmatpush1.msra.mxu0 %v50
    %81 = vmatprep.subr.mxu0 0.0
    %82 = vmatpush1.msra.mxu0 %v49
    %83 = vmatprep.subr.mxu0 0.0
    %84 = vmatpush1.msra.mxu0 %v48
    %85 = vmatprep.subr.mxu0 0.0
    %86 = vmatpush1.msra.mxu0 %v47
    %87 = vmatprep.subr.mxu0 0.0
    %88 = vmatpush1.msra.mxu0 %v46
    %89 = vmatprep.subr.mxu0 0.0
    %90 = vmatpush1.msra.mxu0 %v45
    %91 = vmatprep.subr.mxu0 0.0
    %92 = vmatpush1.msra.mxu0 %v44
    %93 = vmatprep.subr.mxu0 0.0
    %94 = vmatpush1.msra.mxu0 %v43
    %95 = vmatprep.subr.mxu0 0.0
    %96 = vmatpush1.msra.mxu0 %v42
    %97 = vmatprep.subr.mxu0 0.0
    %98 = vmatpush2.msra.mxu0 0.0
    %99 = vmatprep.subr.mxu0 0.0
    %100 = vmatpush2.msra.mxu0 0.0
    %101 = vmatprep.subr.mxu0 0.0
    %102 = vmatpush2.msra.mxu0 0.0
    %103 = vmatprep.subr.mxu0 0.0
    %104 = vmatpush2.msra.mxu0 0.0
    %105 = vmatprep.subr.mxu0 0.0
    %106 = vmatpush2.msra.mxu0 0.0
    %107 = vmatprep.subr.mxu0 0.0
    %108 = vmatpush2.msra.mxu0 0.0
    %109 = vmatprep.subr.mxu0 0.0
    %110 = vmatpush2.msra.mxu0 0.0
    %111 = vmatprep.subr.mxu0 0.0
    %112 = vmatpush2.msra.mxu0 0.0
    %113 = vmatprep.subr.mxu0 0.0
    %114 = vmatpush2.msra.mxu0 0.0
    %115 = vmatprep.subr.mxu0 0.0
    %116 = vmatpush2.msra.mxu0 0.0
    %117 = vmatprep.subr.mxu0 0.0
    %118 = vmatpush2.msra.mxu0 0.0
    %119 = vmatprep.subr.mxu0 0.0
    %120 = vmatpush2.msra.mxu0 0.0
    %121 = vmatprep.subr.mxu0 0.0
    %122 = vmatpush2.msra.mxu0 0.0
    %123 = vmatprep.subr.mxu0 0.0
    %124 = vmatpush2.msra.mxu0 0.0
    %125 = vmatprep.subr.mxu0 0.0
    %126 = vmatpush2.msra.mxu0 0.0
    %127 = vmatprep.subr.mxu0 0.0
    %128 = vmatpush2.msra.mxu0 0.0
    %129 = vmatprep.mubr.f32.mxu0 0.0
    %130 = vmatmul.mubr.f32.gmra.mxu0 %v41
    %v131 = vpop.f32.mrf.mxu0
    %v132 = vadd.f32 %v63, %v131
    %v133 = vpop.f32.mrf.mxu0
    %134 = vdwg.mxu0
    %135 = vst [vmem:[#allocation7] sm:$0xff] %v132
    // Predicated region
    $region22: #{tpu_custom_call.1} parent=1 // pred_check
      _
    $region23: #{tpu_custom_call.1} parent=1 // pred_check_branch
      %137 = sbr.rel (0) target = $region25
    $region24: #{tpu_custom_call.1} parent=1 // pred_region
      %s139 = ssub.s32 128, 128
      %140 = vsyncadd [#allocation4], %s139
      %s142 = sshll.u32 [#allocation7], 4
      %s143 = int_to_ptr.vmem [resolvable:$true] %s142
      %145 = dma.vmem_to_hbm [thread:$0]  %s143, 128, %s3, [#allocation4]
    $region25: #{tpu_custom_call.1} parent=1 // pred_fallthru
      _
    // Predicated region
    $region26: #{tpu_custom_call.1} parent=1 // pred_check
      _
    $region27: #{tpu_custom_call.1} parent=1 // pred_check_branch
      %147 = sbr.rel (0) target = $region29
    $region28: #{tpu_custom_call.1} parent=1 // pred_region
      %148 = dma.done [#allocation4], 128
    $region29: #{tpu_custom_call.1} parent=1 // pred_fallthru
      _
    %149 = vsyncpa [#allocation3], 1
    %150 = vsyncpa [#allocation6], 1
    %151 = vsyncpa [#allocation4], 1

</llo_original>
